<compile_context>
chip_gen: v5e
topology: v5e:2x2
jax: 0.10.0
libtpu: 0.0.40
codegen_flags: <defaults>
</compile_context>

<pallas_src>
import functools

import jax
import jax.numpy as jnp
from jax.experimental import pallas as pl
from jax.experimental.pallas import tpu as pltpu


def _prompt_concat_kernel(prefix_ref, ctx_ref, suffix_ref, out_ref, *, n_ctx):
    """One grid step assembles the prompts for a tile of `tc` classes.

    prefix_ref: (tc, 1, dim)      ctx_ref: (n_ctx, dim)
    suffix_ref: (tc, L_suf, dim)  out_ref: (tc, 1 + n_ctx + L_suf, dim)
    """
    tc, _, dim = out_ref.shape
    # prefix -> out[:, 0:1, :]
    out_ref[:, 0:1, :] = prefix_ref[...]
    # shared ctx, replicated across the class tile -> out[:, 1:1+n_ctx, :]
    ctx = ctx_ref[...]
    out_ref[:, 1:1 + n_ctx, :] = jnp.broadcast_to(ctx[None, :, :], (tc, n_ctx, dim))
    # suffix -> out[:, 1+n_ctx:, :]
    out_ref[:, 1 + n_ctx:, :] = suffix_ref[...]


# Per-step output-slab budget.  Double-buffered inputs + output stay under
# ~16 MiB total, far below the scoped-VMEM default on v5e/v6e/v7x, while
# tiles are large enough that the ~0.35 us per-step overhead is amortized.
_OUT_BLOCK_BUDGET_BYTES = 4 * 1024 * 1024


def prompt_learner_forward(ctx, token_prefix, token_suffix):
    """ctx: (n_ctx, dim); token_prefix: (n_cls, 1, dim);
    token_suffix: (n_cls, L_suf, dim).  Returns (n_cls, 1+n_ctx+L_suf, dim)."""
    n_cls, _, dim = token_prefix.shape
    n_ctx = ctx.shape[0]
    l_suf = token_suffix.shape[1]
    seq = 1 + n_ctx + l_suf
    dtype = token_prefix.dtype
    itemsize = jnp.dtype(dtype).itemsize

    # Class tile: as many classes per grid step as fit the VMEM budget.
    per_class_bytes = seq * dim * itemsize
    tc = max(1, min(n_cls, _OUT_BLOCK_BUDGET_BYTES // per_class_bytes))
    grid = (pl.cdiv(n_cls, tc),)

    kernel = functools.partial(_prompt_concat_kernel, n_ctx=n_ctx)

    total_bytes = (token_prefix.size + ctx.size + token_suffix.size
                   + n_cls * seq * dim) * itemsize
    cost = pl.CostEstimate(flops=0, transcendentals=0, bytes_accessed=total_bytes)

    return pl.pallas_call(
        kernel,
        out_shape=jax.ShapeDtypeStruct((n_cls, seq, dim), dtype),
        grid_spec=pltpu.PrefetchScalarGridSpec(
            num_scalar_prefetch=0,
            grid=grid,
            in_specs=[
                pl.BlockSpec((tc, 1, dim), lambda i: (i, 0, 0)),       # prefix
                pl.BlockSpec((n_ctx, dim), lambda i: (0, 0)),          # ctx (shared, resident)
                pl.BlockSpec((tc, l_suf, dim), lambda i: (i, 0, 0)),   # suffix
            ],
            out_specs=pl.BlockSpec((tc, seq, dim), lambda i: (i, 0, 0)),
        ),
        compiler_params=pltpu.CompilerParams(
            dimension_semantics=("parallel",),   # v7x: shard classes over 2 TCs
        ),
        cost_estimate=cost,
    )(token_prefix, ctx, token_suffix)


if __name__ == "__main__":
    # Small shapes consistent with the module: n_ctx=4 ('a photo of a'),
    # a handful of classes, short context length, lane-dense embedding dim.
    n_cls, n_ctx, seq_len, dim = 8, 4, 16, 128
    l_suf = seq_len - 1 - n_ctx

    key = jax.random.PRNGKey(0)
    k_ctx, k_pre, k_suf = jax.random.split(key, 3)
    ctx = jax.random.normal(k_ctx, (n_ctx, dim), dtype=jnp.float32)
    token_prefix = jax.random.normal(k_pre, (n_cls, 1, dim), dtype=jnp.float32)
    token_suffix = jax.random.normal(k_suf, (n_cls, l_suf, dim), dtype=jnp.float32)

    prompts = prompt_learner_forward(ctx, token_prefix, token_suffix)
    jax.block_until_ready(prompts)

    # Pure-JAX reference of the same forward pass (exact copy, so exact match).
    ref = jnp.concatenate(
        [token_prefix,
         jnp.broadcast_to(ctx[None, :, :], (n_cls, n_ctx, dim)),
         token_suffix],
        axis=1)
    assert prompts.shape == (n_cls, seq_len, dim)
    assert jnp.array_equal(prompts, ref), "mismatch vs reference"

    # TODO(synk): CLIP tokenization / token_embedding in __init__ is host-side
    # setup producing the buffers above; it is not part of forward() and is not
    # translated to Pallas.
    print("KERNEL_OK")
</pallas_src>

<mosaic_0001>
module attributes {stable_mosaic.version = 11 : i64} {
  func.func @_prompt_concat_kernel(%arg0: i32, %arg1: memref<8x1x128xf32, #tpu.memory_space<vmem>>, %arg2: memref<4x128xf32, #tpu.memory_space<vmem>>, %arg3: memref<8x11x128xf32, #tpu.memory_space<vmem>>, %arg4: memref<8x16x128xf32, #tpu.memory_space<vmem>>) attributes {dimension_semantics = [#tpu.dimension_semantics<parallel>], iteration_bounds = array<i64: 1>, scalar_prefetch = 0 : i64, scratch_operands = 0 : i64, tpu.core_type = #tpu.core_type<tc>, window_params = [{transform_indices = @transform_0, window_bounds = array<i64: 8, 1, 128>}, {pipeline_mode = #tpu.pipeline_mode<synchronous>, transform_indices = @transform_1, window_bounds = array<i64: 4, 128>}, {transform_indices = @transform_2, window_bounds = array<i64: 8, 11, 128>}, {transform_indices = @transform_3, window_bounds = array<i64: 8, 16, 128>}]} {
    %c0 = arith.constant 0 : index
    %c0_0 = arith.constant 0 : index
    %c0_1 = arith.constant 0 : index
    %0 = vector.load %arg1[%c0, %c0_0, %c0_1] : memref<8x1x128xf32, #tpu.memory_space<vmem>>, vector<8x1x128xf32>
    %c0_2 = arith.constant 0 : index
    %c0_3 = arith.constant 0 : index
    %c0_4 = arith.constant 0 : index
    %1 = vector.load %arg4[%c0_2, %c0_3, %c0_4] : memref<8x16x128xf32, #tpu.memory_space<vmem>>, vector<8x1x128xf32>
    tpu.vector_store %arg4[%c0_2, %c0_3, %c0_4], %0 {strides = array<i32>} : memref<8x16x128xf32, #tpu.memory_space<vmem>>, vector<8x1x128xf32>,
    %c0_5 = arith.constant 0 : index
    %c0_6 = arith.constant 0 : index
    %2 = vector.load %arg2[%c0_5, %c0_6] : memref<4x128xf32, #tpu.memory_space<vmem>>, vector<4x128xf32>
    %3 = vector.shape_cast %2 : vector<4x128xf32> to vector<1x4x128xf32>
    %4 = vector.shape_cast %3 : vector<1x4x128xf32> to vector<1x4x128xf32>
    %5 = vector.broadcast %4 : vector<1x4x128xf32> to vector<8x4x128xf32>
    %c0_7 = arith.constant 0 : index
    %c1 = arith.constant 1 : index
    %c0_8 = arith.constant 0 : index
    %6 = vector.load %arg4[%c0_7, %c1, %c0_8] : memref<8x16x128xf32, #tpu.memory_space<vmem>>, vector<8x4x128xf32>
    tpu.vector_store %arg4[%c0_7, %c1, %c0_8], %5 {strides = array<i32>} : memref<8x16x128xf32, #tpu.memory_space<vmem>>, vector<8x4x128xf32>,
    %c0_9 = arith.constant 0 : index
    %c0_10 = arith.constant 0 : index
    %c0_11 = arith.constant 0 : index
    %7 = vector.load %arg3[%c0_9, %c0_10, %c0_11] : memref<8x11x128xf32, #tpu.memory_space<vmem>>, vector<8x11x128xf32>
    %c0_12 = arith.constant 0 : index
    %c5 = arith.constant 5 : index
    %c0_13 = arith.constant 0 : index
    %8 = vector.load %arg4[%c0_12, %c5, %c0_13] : memref<8x16x128xf32, #tpu.memory_space<vmem>>, vector<8x11x128xf32>
    tpu.vector_store %arg4[%c0_12, %c5, %c0_13], %7 {strides = array<i32>} : memref<8x16x128xf32, #tpu.memory_space<vmem>>, vector<8x11x128xf32>,
    return
  }
  func.func @transform_0(%arg0: i32) -> (i32, i32, i32) {
    %c0_i32 = arith.constant 0 : i32
    %c0_i32_0 = arith.constant 0 : i32
    %c0_i32_1 = arith.constant 0 : i32
    return %arg0, %c0_i32, %c0_i32_0 : i32, i32, i32
  }
  func.func @transform_1(%arg0: i32) -> (i32, i32) {
    %c0_i32 = arith.constant 0 : i32
    %c0_i32_0 = arith.constant 0 : i32
    %c0_i32_1 = arith.constant 0 : i32
    return %c0_i32, %c0_i32_0 : i32, i32
  }
  func.func @transform_2(%arg0: i32) -> (i32, i32, i32) {
    %c0_i32 = arith.constant 0 : i32
    %c0_i32_0 = arith.constant 0 : i32
    %c0_i32_1 = arith.constant 0 : i32
    return %arg0, %c0_i32, %c0_i32_0 : i32, i32, i32
  }
  func.func @transform_3(%arg0: i32) -> (i32, i32, i32) {
    %c0_i32 = arith.constant 0 : i32
    %c0_i32_0 = arith.constant 0 : i32
    %c0_i32_1 = arith.constant 0 : i32
    return %arg0, %c0_i32, %c0_i32_0 : i32, i32, i32
  }
}

</mosaic_0001>

<llo_original>
// kernel: tpu_custom_call.1
$region0: #{tpu_custom_call.1}
  #allocation0 [shape = 'u32[]', space=smem, size = 0x4, offset = 0x4, fixed_abs, tag = 'smem constant byte address 0x4 - core index']
  #allocation1 [shape = 'u32[72,128]{1,0:T(1,128)}', space=vmem, size = 0x9000, scoped, tag = 'internal scratch']
  %s0 = inlined_call_operand.vmem [shape: f32[8,1,128], index: 0, kind: input, shape index: {}]
  %s1 = inlined_call_operand.vmem [shape: f32[4,128], index: 1, kind: input, shape index: {}]
  %s2 = inlined_call_operand.vmem [shape: f32[8,11,128], index: 2, kind: input, shape index: {}]
  %s3 = inlined_call_operand.hbm [shape: f32[8,16,128], index: 3, kind: output, shape index: {}]
  %s4 = sld [smem:[#allocation0]]
  $region22: #{tpu_custom_call.1} parent=0
    _
  %s6 = ssub.s32 1, %s4
  %s7 = scalar_select 0, %s6, %s4
  $region1: #{tpu_custom_call.1} parent=0
    #allocation2 [shape = 'u8[65536]{0}', space=vmem, size = 0x10000, scoped, tag = 'output window, operand 0, single buffered']
    #allocation3 [shape = 's32[1]{0}', space=sflag, size = 0x4, scoped, tag = 'scoped memory for tpu_custom_call.1']
    %8 = vsyncpa [#allocation3], 0
    // Predicated region
    $region2: #{tpu_custom_call.1} parent=1 // pred_check
      _
    $region3: #{tpu_custom_call.1} parent=1 // pred_check_branch
      %10 = sbr.rel (0) target = $region5
    $region4: #{tpu_custom_call.1} parent=1 // pred_region
      _
    $region5: #{tpu_custom_call.1} parent=1 // pred_fallthru
      _
    // Predicated region
    $region6: #{tpu_custom_call.1} parent=1 // pred_check
      _
    $region7: #{tpu_custom_call.1} parent=1 // pred_check_branch
      %12 = sbr.rel (0) target = $region9
    $region8: #{tpu_custom_call.1} parent=1 // pred_region
      _
    $region9: #{tpu_custom_call.1} parent=1 // pred_fallthru
      _
    // Predicated region
    $region10: #{tpu_custom_call.1} parent=1 // pred_check
      _
    $region11: #{tpu_custom_call.1} parent=1 // pred_check_branch
      %14 = sbr.rel (0) target = $region13
    $region12: #{tpu_custom_call.1} parent=1 // pred_region
      _
    $region13: #{tpu_custom_call.1} parent=1 // pred_fallthru
      _
    %v15 = vld [vmem:[%s0] sm:$0x1]
    %v16 = vld [vmem:[%s0 + $0x1] sm:$0x1]
    %v17 = vld [vmem:[%s0 + $0x2] sm:$0x1]
    %v18 = vld [vmem:[%s0 + $0x3] sm:$0x1]
    %v19 = vld [vmem:[%s0 + $0x4] sm:$0x1]
    %v20 = vld [vmem:[%s0 + $0x5] sm:$0x1]
    %v21 = vld [vmem:[%s0 + $0x6] sm:$0x1]
    %v22 = vld [vmem:[%s0 + $0x7] sm:$0x1]
    %23 = vst [vmem:[#allocation2] sm:$0x1] %v15
    %24 = vst [vmem:[#allocation2 + $0x10] sm:$0x1] %v16
    %25 = vst [vmem:[#allocation2 + $0x20] sm:$0x1] %v17
    %26 = vst [vmem:[#allocation2 + $0x30] sm:$0x1] %v18
    %27 = vst [vmem:[#allocation2 + $0x40] sm:$0x1] %v19
    %28 = vst [vmem:[#allocation2 + $0x50] sm:$0x1] %v20
    %29 = vst [vmem:[#allocation2 + $0x60] sm:$0x1] %v21
    %30 = vst [vmem:[#allocation2 + $0x70] sm:$0x1] %v22
    %v31 = vld [vmem:[%s1] sm:$0xf]
    %32 = vst [vmem:[#allocation2 + $0x1] sm:$0xf] %v31
    %33 = vst [vmem:[#allocation2 + $0x11] sm:$0xf] %v31
    %34 = vst [vmem:[#allocation2 + $0x21] sm:$0xf] %v31
    %35 = vst [vmem:[#allocation2 + $0x31] sm:$0xf] %v31
    %36 = vst [vmem:[#allocation2 + $0x41] sm:$0xf] %v31
    %37 = vst [vmem:[#allocation2 + $0x51] sm:$0xf] %v31
    %38 = vst [vmem:[#allocation2 + $0x61] sm:$0xf] %v31
    %39 = vst [vmem:[#allocation2 + $0x71] sm:$0xf] %v31
    %v40 = vld [vmem:[%s2] sm:$0xff]
    %v41 = vld [vmem:[%s2 + $0x8] sm:$0x7]
    %v42 = vld [vmem:[%s2 + $0x10] sm:$0xff]
    %v43 = vld [vmem:[%s2 + $0x18] sm:$0x7]
    %v44 = vld [vmem:[%s2 + $0x20] sm:$0xff]
    %v45 = vld [vmem:[%s2 + $0x28] sm:$0x7]
    %v46 = vld [vmem:[%s2 + $0x30] sm:$0xff]
    %v47 = vld [vmem:[%s2 + $0x38] sm:$0x7]
    %v48 = vld [vmem:[%s2 + $0x40] sm:$0xff]
    %v49 = vld [vmem:[%s2 + $0x48] sm:$0x7]
    %v50 = vld [vmem:[%s2 + $0x50] sm:$0xff]
    %v51 = vld [vmem:[%s2 + $0x58] sm:$0x7]
    %v52 = vld [vmem:[%s2 + $0x60] sm:$0xff]
    %v53 = vld [vmem:[%s2 + $0x68] sm:$0x7]
    %v54 = vld [vmem:[%s2 + $0x70] sm:$0xff]
    %v55 = vld [vmem:[%s2 + $0x78] sm:$0x7]
    %56 = vst [vmem:[#allocation2 + $0x5] sm:$0xff] %v40
    %57 = vst [vmem:[#allocation2 + $0xd] sm:$0x7] %v41
    %58 = vst [vmem:[#allocation2 + $0x15] sm:$0xff] %v42
    %59 = vst [vmem:[#allocation2 + $0x1d] sm:$0x7] %v43
    %60 = vst [vmem:[#allocation2 + $0x25] sm:$0xff] %v44
    %61 = vst [vmem:[#allocation2 + $0x2d] sm:$0x7] %v45
    %62 = vst [vmem:[#allocation2 + $0x35] sm:$0xff] %v46
    %63 = vst [vmem:[#allocation2 + $0x3d] sm:$0x7] %v47
    %64 = vst [vmem:[#allocation2 + $0x45] sm:$0xff] %v48
    %65 = vst [vmem:[#allocation2 + $0x4d] sm:$0x7] %v49
    %66 = vst [vmem:[#allocation2 + $0x55] sm:$0xff] %v50
    %67 = vst [vmem:[#allocation2 + $0x5d] sm:$0x7] %v51
    %68 = vst [vmem:[#allocation2 + $0x65] sm:$0xff] %v52
    %69 = vst [vmem:[#allocation2 + $0x6d] sm:$0x7] %v53
    %70 = vst [vmem:[#allocation2 + $0x75] sm:$0xff] %v54
    %71 = vst [vmem:[#allocation2 + $0x7d] sm:$0x7] %v55
    // Predicated region
    $region14: #{tpu_custom_call.1} parent=1 // pred_check
      _
    $region15: #{tpu_custom_call.1} parent=1 // pred_check_branch
      %73 = sbr.rel (0) target = $region17
    $region16: #{tpu_custom_call.1} parent=1 // pred_region
      %75 = vsyncadd [#allocation3], 0
      %s76 = sshll.u32 [#allocation2], 4
      %s77 = int_to_ptr.vmem [resolvable:$true] %s76
      %s78 = sshll.u32 %s3, 4
      %s79 = int_to_ptr.hbm [resolvable:$true] %s78
      %84 = dma.vmem_to_hbm [thread:$0]  %s77, 2048, %s79, [#allocation3], 128, 128, 8
    $region17: #{tpu_custom_call.1} parent=1 // pred_fallthru
      _
    // Predicated region
    $region18: #{tpu_custom_call.1} parent=1 // pred_check
      _
    $region19: #{tpu_custom_call.1} parent=1 // pred_check_branch
      %86 = sbr.rel (0) target = $region21
    $region20: #{tpu_custom_call.1} parent=1 // pred_region
      %88 = dma.done [#allocation3], 2048
    $region21: #{tpu_custom_call.1} parent=1 // pred_fallthru
      _
    %89 = vsyncpa [#allocation3], 1

</llo_original>
